<compile_context>
chip_gen: v6e
topology: v6e:2x2x1
jax: 0.10.0
libtpu: 0.0.40
codegen_flags: <defaults>
</compile_context>

<pallas_src>
import jax
import jax.numpy as jnp
from jax import lax
from jax.experimental import pallas as pl
from jax.experimental.pallas import tpu as pltpu

EPS = 1e-5


def _vmem_capacity_bytes():
    """Per-core VMEM capacity; conservative (v7x = 64 MiB) fallback."""
    try:
        return int(pltpu.get_tpu_info().vmem_capacity_bytes)
    except Exception:
        return 64 << 20


def _chan_tile(c):
    """Sublane (channel) tile: a multiple of 8 that divides C, else full C."""
    if c % 8 != 0:
        return c
    ct = min(c, 64)
    ct -= ct % 8
    while c % ct != 0:
        ct -= 8
    return ct


def _lane_tile(hw, bytes_per_lane, block_budget_bytes, cap_lanes):
    """Lane (HW) tile: multiple of 128 within a byte budget, or full extent."""
    if hw <= 128:
        return hw
    by_budget = block_budget_bytes // max(bytes_per_lane, 1)
    t = min((hw // 128) * 128, by_budget, cap_lanes)
    return max(128, (t // 128) * 128)


def conditional_norm(x_nchw, condition, w1, b1, w2, b2,
                     *, force_two_pass=False, max_lane_tile=4096):
    """x_nchw: (B, C, H, W); condition: (B, D); w*: (D, C); b*: (C,)."""
    B, C, H, W = x_nchw.shape
    HW = H * W
    inv_n = 1.0 / float(B * HW)          # biased variance, like BatchNorm2d
    x_dtype = x_nchw.dtype
    itemsize = jnp.dtype(x_dtype).itemsize

    x3 = x_nchw.reshape(B, C, HW)

    # gamma/beta from the two tiny Linears (do not touch x; hoisted out of the
    # tiled kernels, packed into one lane-2 array so pass 2 has a single small
    # per-channel-tile input instead of two width-1 ones).
    cond = condition.astype(jnp.float32)
    gamma = cond @ w1.astype(jnp.float32) + b1.astype(jnp.float32)   # (B, C)
    beta = cond @ w2.astype(jnp.float32) + b2.astype(jnp.float32)    # (B, C)
    gb = jnp.stack([gamma, beta], axis=-1)                           # (B, C, 2)

    vmem_cap = _vmem_capacity_bytes()
    x_bytes = B * C * HW * itemsize
    use_fused = (not force_two_pass) and (2 * x_bytes <= int(0.4 * vmem_cap))

    # ------------------------- fused (VMEM-resident) path -------------------
    if use_fused:
        def fused_kernel(x_ref, gb_ref, o_ref):
            x = x_ref[...].astype(jnp.float32)                 # (B, C, HW)
            s = jnp.sum(x, axis=2, keepdims=True)              # (B, C, 1)
            q = jnp.sum(x * x, axis=2, keepdims=True)
            s = jnp.sum(s, axis=0, keepdims=True)              # (1, C, 1)
            q = jnp.sum(q, axis=0, keepdims=True)
            mean = s * inv_n
            var = jnp.maximum(q * inv_n - mean * mean, 0.0)
            inv_std = lax.rsqrt(var + EPS)
            scale = gb_ref[..., 0:1] * inv_std                 # (B, C, 1)
            shift = gb_ref[..., 1:2] - scale * mean
            o_ref[...] = (x * scale + shift).astype(o_ref.dtype)

        out3 = pl.pallas_call(
            fused_kernel,
            out_shape=jax.ShapeDtypeStruct((B, C, HW), x_dtype),
            grid=(1,),
            in_specs=[pl.BlockSpec((B, C, HW), lambda i: (0, 0, 0)),
                      pl.BlockSpec((B, C, 2), lambda i: (0, 0, 0))],
            out_specs=pl.BlockSpec((B, C, HW), lambda i: (0, 0, 0)),
            compiler_params=pltpu.CompilerParams(
                dimension_semantics=("arbitrary",),
                vmem_limit_bytes=int(0.9 * vmem_cap)),
        )(x3, gb)
        return out3.reshape(B, C, H, W)

    # ------------------------------ two-pass path ---------------------------
    Ct = _chan_tile(C)
    nC = C // Ct
    bpl = B * Ct * itemsize              # bytes per lane column of an x block

    # Pass 1 only pipelines the input (stats output is a tiny resident block),
    # so it can use larger lane tiles than pass 2 (which buffers in + out).
    t1 = _lane_tile(HW, bpl, 4 << 20, max_lane_tile)
    nJ1 = pl.cdiv(HW, t1)

    def stats_kernel(x_ref, st_ref):
        j = pl.program_id(1)

        @pl.when(j == 0)
        def _():
            st_ref[...] = jnp.zeros_like(st_ref)

        x = x_ref[...].astype(jnp.float32)                     # (B, Ct, t1)
        if HW % t1 != 0:   # static: mask padded tail lanes of the last tile
            lane = lax.broadcasted_iota(jnp.int32, x.shape, 2)
            x = jnp.where(j * t1 + lane < HW, x, 0.0)
        st_ref[..., 0:1] += jnp.sum(jnp.sum(x, axis=2, keepdims=True),
                                    axis=0, keepdims=True)
        st_ref[..., 1:2] += jnp.sum(jnp.sum(x * x, axis=2, keepdims=True),
                                    axis=0, keepdims=True)

    blk1 = B * Ct * t1 * itemsize
    stats = pl.pallas_call(
        stats_kernel,
        out_shape=jax.ShapeDtypeStruct((1, C, 2), jnp.float32),
        grid=(nC, nJ1),
        in_specs=[pl.BlockSpec((B, Ct, t1), lambda i, j: (0, i, j))],
        out_specs=pl.BlockSpec((1, Ct, 2), lambda i, j: (0, i, 0)),
        compiler_params=pltpu.CompilerParams(
            dimension_semantics=("parallel", "arbitrary"),
            vmem_limit_bytes=int(min(0.9 * vmem_cap,
                                     max(16 << 20, 2 * blk1 + (4 << 20))))),
    )(x3)

    # Pass 2: mean/var finalization + affine fold done inside the kernel.
    t2 = _lane_tile(HW, bpl, 2 << 20, max_lane_tile)
    nJ2 = pl.cdiv(HW, t2)

    def apply_kernel(x_ref, st_ref, gb_ref, o_ref):
        s = st_ref[..., 0:1]                                   # (1, Ct, 1)
        q = st_ref[..., 1:2]
        mean = s * inv_n
        var = jnp.maximum(q * inv_n - mean * mean, 0.0)
        inv_std = lax.rsqrt(var + EPS)
        scale = gb_ref[..., 0:1] * inv_std                     # (B, Ct, 1)
        shift = gb_ref[..., 1:2] - scale * mean
        o_ref[...] = (x_ref[...].astype(jnp.float32) * scale + shift
                      ).astype(o_ref.dtype)

    blk2 = B * Ct * t2 * itemsize
    out3 = pl.pallas_call(
        apply_kernel,
        out_shape=jax.ShapeDtypeStruct((B, C, HW), x_dtype),
        grid=(nC, nJ2),
        in_specs=[pl.BlockSpec((B, Ct, t2), lambda i, j: (0, i, j)),
                  pl.BlockSpec((1, Ct, 2), lambda i, j: (0, i, 0)),
                  pl.BlockSpec((B, Ct, 2), lambda i, j: (0, i, 0))],
        out_specs=pl.BlockSpec((B, Ct, t2), lambda i, j: (0, i, j)),
        compiler_params=pltpu.CompilerParams(
            dimension_semantics=("parallel", "parallel"),
            vmem_limit_bytes=int(min(0.9 * vmem_cap,
                                     max(16 << 20, 4 * blk2 + (4 << 20))))),
    )(x3, stats, gb)
    return out3.reshape(B, C, H, W)


def _reference(x, cond, w1, b1, w2, b2):
    mean = x.mean(axis=(0, 2, 3), keepdims=True)
    var = ((x - mean) ** 2).mean(axis=(0, 2, 3), keepdims=True)
    xn = (x - mean) / jnp.sqrt(var + EPS)
    gamma = cond @ w1 + b1
    beta = cond @ w2 + b2
    return gamma[:, :, None, None] * xn + beta[:, :, None, None]


def _make_inputs(key, B, C, H, W, D):
    kx, kc, kw1, kb1, kw2, kb2 = jax.random.split(key, 6)
    x = jax.random.normal(kx, (B, C, H, W), dtype=jnp.float32)
    cond = jax.random.normal(kc, (B, D), dtype=jnp.float32)
    bound = 1.0 / (D ** 0.5)   # torch Linear init; weights stored as (D, C)
    w1 = jax.random.uniform(kw1, (D, C), jnp.float32, -bound, bound)
    b1 = jax.random.uniform(kb1, (C,), jnp.float32, -bound, bound)
    w2 = jax.random.uniform(kw2, (D, C), jnp.float32, -bound, bound)
    b2 = jax.random.uniform(kb2, (C,), jnp.float32, -bound, bound)
    return x, cond, w1, b1, w2, b2


if __name__ == "__main__":
    key = jax.random.PRNGKey(0)

    # 1) Small shape from the module -> fused single-kernel path.
    args = _make_inputs(key, 2, 4, 16, 16, 32)
    out = jax.block_until_ready(conditional_norm(*args))
    ref = _reference(*args)
    assert out.shape == (2, 4, 16, 16)
    assert jnp.allclose(out, ref, atol=1e-4, rtol=1e-4), (
        float(jnp.max(jnp.abs(out - ref))))

    # 2) Same shape, forced onto the two-pass (large-x) path.
    out2 = jax.block_until_ready(conditional_norm(*args, force_two_pass=True))
    assert jnp.allclose(out2, ref, atol=1e-4, rtol=1e-4), (
        float(jnp.max(jnp.abs(out2 - ref))))

    # 3) Two-pass path with multiple HW tiles (exercises the j accumulation).
    key2 = jax.random.PRNGKey(0)
    args3 = _make_inputs(key2, 2, 4, 16, 32, 32)
    out3 = jax.block_until_ready(
        conditional_norm(*args3, force_two_pass=True, max_lane_tile=128))
    ref3 = _reference(*args3)
    assert jnp.allclose(out3, ref3, atol=1e-4, rtol=1e-4), (
        float(jnp.max(jnp.abs(out3 - ref3))))

    print("KERNEL_OK")
</pallas_src>

<mosaic_0001>
module attributes {stable_mosaic.version = 11 : i64} {
  func.func @fused_kernel(%arg0: i32, %arg1: memref<2x4x256xf32, #tpu.memory_space<vmem>>, %arg2: memref<2x4x2xf32, #tpu.memory_space<vmem>>, %arg3: memref<2x4x256xf32, #tpu.memory_space<vmem>>) attributes {dimension_semantics = [#tpu.dimension_semantics<arbitrary>], iteration_bounds = array<i64: 1>, scalar_prefetch = 0 : i64, scratch_operands = 0 : i64, tpu.core_type = #tpu.core_type<tc>, window_params = [{pipeline_mode = #tpu.pipeline_mode<synchronous>, transform_indices = @transform_0, window_bounds = array<i64: 2, 4, 256>}, {pipeline_mode = #tpu.pipeline_mode<synchronous>, transform_indices = @transform_1, window_bounds = array<i64: 2, 4, 2>}, {pipeline_mode = #tpu.pipeline_mode<synchronous>, transform_indices = @transform_2, window_bounds = array<i64: 2, 4, 256>}]} {
    %c0 = arith.constant 0 : index
    %c0_0 = arith.constant 0 : index
    %c0_1 = arith.constant 0 : index
    %0 = vector.load %arg1[%c0, %c0_0, %c0_1] : memref<2x4x256xf32, #tpu.memory_space<vmem>>, vector<2x4x256xf32>
    %cst = arith.constant dense<0.000000e+00> : vector<2x4xf32>
    %1 = vector.multi_reduction <add>, %0, %cst [2] : vector<2x4x256xf32> to vector<2x4xf32>
    %2 = vector.shape_cast %1 : vector<2x4xf32> to vector<2x4x1xf32>
    %3 = arith.mulf %0, %0 : vector<2x4x256xf32>
    %cst_2 = arith.constant dense<0.000000e+00> : vector<2x4xf32>
    %4 = vector.multi_reduction <add>, %3, %cst_2 [2] : vector<2x4x256xf32> to vector<2x4xf32>
    %5 = vector.shape_cast %4 : vector<2x4xf32> to vector<2x4x1xf32>
    %cst_3 = arith.constant dense<0.000000e+00> : vector<4x1xf32>
    %6 = vector.multi_reduction <add>, %2, %cst_3 [0] : vector<2x4x1xf32> to vector<4x1xf32>
    %7 = vector.shape_cast %6 : vector<4x1xf32> to vector<1x4x1xf32>
    %cst_4 = arith.constant dense<0.000000e+00> : vector<4x1xf32>
    %8 = vector.multi_reduction <add>, %5, %cst_4 [0] : vector<2x4x1xf32> to vector<4x1xf32>
    %9 = vector.shape_cast %8 : vector<4x1xf32> to vector<1x4x1xf32>
    %cst_5 = arith.constant 0.001953125 : f32
    %10 = vector.broadcast %cst_5 : f32 to vector<1x4x1xf32>
    %11 = arith.mulf %7, %10 : vector<1x4x1xf32>
    %cst_6 = arith.constant 0.001953125 : f32
    %12 = vector.broadcast %cst_6 : f32 to vector<1x4x1xf32>
    %13 = arith.mulf %9, %12 : vector<1x4x1xf32>
    %14 = arith.mulf %11, %11 : vector<1x4x1xf32>
    %15 = arith.subf %13, %14 : vector<1x4x1xf32>
    %cst_7 = arith.constant 0.000000e+00 : f32
    %16 = vector.broadcast %cst_7 : f32 to vector<1x4x1xf32>
    %17 = arith.maximumf %15, %16 : vector<1x4x1xf32>
    %cst_8 = arith.constant 9.99999974E-6 : f32
    %18 = vector.broadcast %cst_8 : f32 to vector<1x4x1xf32>
    %19 = arith.addf %17, %18 : vector<1x4x1xf32>
    %20 = math.rsqrt %19 : vector<1x4x1xf32>
    %c0_9 = arith.constant 0 : index
    %c0_10 = arith.constant 0 : index
    %c0_11 = arith.constant 0 : index
    %21 = vector.load %arg2[%c0_9, %c0_10, %c0_11] : memref<2x4x2xf32, #tpu.memory_space<vmem>>, vector<2x4x1xf32>
    %22 = vector.broadcast %20 : vector<1x4x1xf32> to vector<2x4x1xf32>
    %23 = arith.mulf %21, %22 : vector<2x4x1xf32>
    %c0_12 = arith.constant 0 : index
    %c0_13 = arith.constant 0 : index
    %c1 = arith.constant 1 : index
    %24 = vector.load %arg2[%c0_12, %c0_13, %c1] : memref<2x4x2xf32, #tpu.memory_space<vmem>>, vector<2x4x1xf32>
    %25 = vector.broadcast %11 : vector<1x4x1xf32> to vector<2x4x1xf32>
    %26 = arith.mulf %23, %25 : vector<2x4x1xf32>
    %27 = arith.subf %24, %26 : vector<2x4x1xf32>
    %28 = vector.broadcast %23 : vector<2x4x1xf32> to vector<2x4x256xf32>
    %29 = arith.mulf %0, %28 : vector<2x4x256xf32>
    %30 = vector.broadcast %27 : vector<2x4x1xf32> to vector<2x4x256xf32>
    %31 = arith.addf %29, %30 : vector<2x4x256xf32>
    %c0_14 = arith.constant 0 : index
    %c0_15 = arith.constant 0 : index
    %c0_16 = arith.constant 0 : index
    %32 = vector.load %arg3[%c0_14, %c0_15, %c0_16] : memref<2x4x256xf32, #tpu.memory_space<vmem>>, vector<2x4x256xf32>
    tpu.vector_store %arg3[%c0_14, %c0_15, %c0_16], %31 {strides = array<i32>} : memref<2x4x256xf32, #tpu.memory_space<vmem>>, vector<2x4x256xf32>,
    return
  }
  func.func @transform_0(%arg0: i32) -> (i32, i32, i32) {
    %c0_i32 = arith.constant 0 : i32
    %c0_i32_0 = arith.constant 0 : i32
    %c0_i32_1 = arith.constant 0 : i32
    %c0_i32_2 = arith.constant 0 : i32
    return %c0_i32, %c0_i32_0, %c0_i32_1 : i32, i32, i32
  }
  func.func @transform_1(%arg0: i32) -> (i32, i32, i32) {
    %c0_i32 = arith.constant 0 : i32
    %c0_i32_0 = arith.constant 0 : i32
    %c0_i32_1 = arith.constant 0 : i32
    %c0_i32_2 = arith.constant 0 : i32
    return %c0_i32, %c0_i32_0, %c0_i32_1 : i32, i32, i32
  }
  func.func @transform_2(%arg0: i32) -> (i32, i32, i32) {
    %c0_i32 = arith.constant 0 : i32
    %c0_i32_0 = arith.constant 0 : i32
    %c0_i32_1 = arith.constant 0 : i32
    %c0_i32_2 = arith.constant 0 : i32
    return %c0_i32, %c0_i32_0, %c0_i32_1 : i32, i32, i32
  }
}

</mosaic_0001>

<llo_original>
// kernel: tpu_custom_call.1
$region0: #{tpu_custom_call.1}
  #allocation0 [shape = 'u32[]', space=smem, size = 0x4, offset = 0x4, fixed_abs, tag = 'smem constant byte address 0x4 - core index']
  #allocation1 [shape = 'u32[144,128]{1,0:T(1,128)}', space=vmem, size = 0x12000, scoped, tag = 'internal scratch']
  %s0 = inlined_call_operand.hbm [shape: f32[2,4,256], index: 0, kind: input, shape index: {}]
  %s1 = inlined_call_operand.vmem [shape: f32[2,4,2], index: 1, kind: input, shape index: {}]
  %s2 = inlined_call_operand.hbm [shape: f32[2,4,256], index: 2, kind: output, shape index: {}]
  %s3 = sld [smem:[#allocation0]]
  $region22: #{tpu_custom_call.1} parent=0
    _
  %s5 = ssub.s32 1, %s3
  %s6 = scalar_select 0, %s5, %s3
  $region1: #{tpu_custom_call.1} parent=0
    #allocation2 [shape = 'u8[8192]{0}', space=vmem, size = 0x2000, scoped, tag = 'input window, operand 0, single buffered']
    #allocation3 [shape = 's32[1]{0}', space=sflag, size = 0x4, scoped, tag = 'scoped memory for tpu_custom_call.1']
    #allocation4 [shape = 's32[1]{0}', space=sflag, size = 0x4, scoped, tag = 'scoped memory for tpu_custom_call.1']
    #allocation5 [shape = 'u8[8192]{0}', space=vmem, size = 0x2000, scoped, tag = 'output window, operand 0, single buffered']
    %7 = vsyncpa [#allocation3], 0
    %8 = vsyncpa [#allocation4], 0
    // Predicated region
    $region2: #{tpu_custom_call.1} parent=1 // pred_check
      _
    $region3: #{tpu_custom_call.1} parent=1 // pred_check_branch
      %10 = sbr.rel (0) target = $region5
    $region4: #{tpu_custom_call.1} parent=1 // pred_region
      %s12 = ssub.s32 256, 256
      %13 = vsyncadd [#allocation3], %s12
      %s14 = sshll.u32 [#allocation2], 4
      %s15 = int_to_ptr.vmem [resolvable:$true] %s14
      %20 = dma.hbm_to_vmem [thread:$0]  %s0, 256, %s15, [#allocation3], 128, 128, 8
    $region5: #{tpu_custom_call.1} parent=1 // pred_fallthru
      _
    // Predicated region
    $region6: #{tpu_custom_call.1} parent=1 // pred_check
      _
    $region7: #{tpu_custom_call.1} parent=1 // pred_check_branch
      %22 = sbr.rel (0) target = $region9
    $region8: #{tpu_custom_call.1} parent=1 // pred_region
      _
    $region9: #{tpu_custom_call.1} parent=1 // pred_fallthru
      _
    // Predicated region
    $region10: #{tpu_custom_call.1} parent=1 // pred_check
      _
    $region11: #{tpu_custom_call.1} parent=1 // pred_check_branch
      %24 = sbr.rel (0) target = $region13
    $region12: #{tpu_custom_call.1} parent=1 // pred_region
      %25 = dma.done [#allocation3], 256
    $region13: #{tpu_custom_call.1} parent=1 // pred_fallthru
      _
    %v26 = vld [vmem:[#allocation2] sm:$0xff]
    %v27 = vld [vmem:[#allocation2 + $0x8] sm:$0xff]
    %v30 = vcombine.high %v26, %v26
    %v31 = vcombine.high %v27, %v27
    %vm34 = vcmask 1043456
    %v35 = vsel %vm34, %v26, 0.0
    %v36 = vsel %vm34, %v30, 0.0
    %v37 = vadd.f32 %v35, %v36
    %38 = vadd.xlane.f32.xlu0 %v37
    %v39 = vpop.xlane.xlu0 %38
    %v40 = vsel %vm34, %v27, 0.0
    %v41 = vsel %vm34, %v31, 0.0
    %v42 = vadd.f32 %v40, %v41
    %43 = vadd.xlane.f32.xlu0 %v42
    %v44 = vpop.xlane.xlu0 %43
    %v45 = vmul.f32 %v26, %v26
    %v46 = vmul.f32 %v27, %v27
    %v49 = vcombine.high %v45, %v45
    %v50 = vcombine.high %v46, %v46
    %v53 = vsel %vm34, %v45, 0.0
    %v54 = vsel %vm34, %v49, 0.0
    %v55 = vadd.f32 %v53, %v54
    %56 = vadd.xlane.f32.xlu0 %v55
    %v57 = vpop.xlane.xlu0 %56
    %v58 = vsel %vm34, %v46, 0.0
    %v59 = vsel %vm34, %v50, 0.0
    %v60 = vadd.f32 %v58, %v59
    %61 = vadd.xlane.f32.xlu0 %v60
    %v62 = vpop.xlane.xlu0 %61
    %v63 = vsel %vm34, %v39, 0.0
    %v64 = vsel %vm34, %v44, 0.0
    %v65 = vadd.f32 %v63, %v64
    %v66 = vsel %vm34, %v57, 0.0
    %v67 = vsel %vm34, %v62, 0.0
    %v68 = vadd.f32 %v66, %v67
    %v69 = vmul.f32 %v65, 0.001953125
    %v70 = vmul.f32 %v68, 0.001953125
    %v71 = vmul.f32 %v69, %v69
    %v72 = vsub.f32 %v70, %v71
    %v73 = vmax.f32 %v72, 0.0
    %v74 = vadd.f32 %v73, 1e-05
    %v75 = vrsqrt.pop %v74
    %v76 = vld [vmem:[%s1] sm:$0xf]
    %v77 = vld [vmem:[%s1 + $0x4] sm:$0xf]
    %v78 = vmul.f32 %v76, %v75
    %v79 = vmul.f32 %v77, %v75
    %v80 = vmul.f32 %v78, %v69
    %v81 = vmul.f32 %v79, %v69
    %84 = vrot.lane.b32.xlu0 %v80, 1
    %v85 = vpop.permute.xlu0 %84
    %86 = vrot.lane.b32.xlu0 %v81, 1
    %v87 = vpop.permute.xlu0 %86
    %v90 = vsub.f32 %v76, %v85
    %v91 = vsub.f32 %v77, %v87
    %93 = vset.pattern.permute.xlu0 0
    %94 = vperm.xlu0 %93, %v78
    %v95 = vpop.permute.xlu0 %94
    %97 = vset.pattern.permute.xlu0 0
    %98 = vperm.xlu0 %97, %v79
    %v99 = vpop.permute.xlu0 %98
    %v101 = vunpack.c.l.s4 839922192
    %v102 = vunpack.c.0.s8 %v101
    %v103 = vlaneseq
    %v104 = vshrl.u32 %v103, 7
    %v105 = vsub.s32 %v102, %v104
    %v106 = vrot.slane %v95, %v105
    %v108 = vunpack.c.l.s4 839922192
    %v109 = vunpack.c.0.s8 %v108
    %v110 = vlaneseq
    %v111 = vshrl.u32 %v110, 7
    %v112 = vsub.s32 %v109, %v111
    %v113 = vrot.slane %v99, %v112
    %v116 = vmul.f32 %v26, %v106
    %v117 = vmul.f32 %v27, %v113
    %119 = vset.pattern.permute.xlu0 1
    %120 = vperm.xlu0 %119, %v90
    %v121 = vpop.permute.xlu0 %120
    %123 = vset.pattern.permute.xlu0 1
    %124 = vperm.xlu0 %123, %v91
    %v125 = vpop.permute.xlu0 %124
    %v127 = vunpack.c.l.s4 839922192
    %v128 = vunpack.c.0.s8 %v127
    %v129 = vlaneseq
    %v130 = vshrl.u32 %v129, 7
    %v131 = vsub.s32 %v128, %v130
    %v132 = vrot.slane %v121, %v131
    %v134 = vunpack.c.l.s4 839922192
    %v135 = vunpack.c.0.s8 %v134
    %v136 = vlaneseq
    %v137 = vshrl.u32 %v136, 7
    %v138 = vsub.s32 %v135, %v137
    %v139 = vrot.slane %v125, %v138
    %v142 = vadd.f32 %v116, %v132
    %v143 = vadd.f32 %v117, %v139
    %144 = vst [vmem:[#allocation5] sm:$0xff] %v142
    %145 = vst [vmem:[#allocation5 + $0x8] sm:$0xff] %v143
    // Predicated region
    $region14: #{tpu_custom_call.1} parent=1 // pred_check
      _
    $region15: #{tpu_custom_call.1} parent=1 // pred_check_branch
      %147 = sbr.rel (0) target = $region17
    $region16: #{tpu_custom_call.1} parent=1 // pred_region
      %s149 = ssub.s32 256, 256
      %150 = vsyncadd [#allocation4], %s149
      %s151 = sshll.u32 [#allocation5], 4
      %s152 = int_to_ptr.vmem [resolvable:$true] %s151
      %157 = dma.vmem_to_hbm [thread:$0]  %s152, 256, %s2, [#allocation4], 128, 128, 8
    $region17: #{tpu_custom_call.1} parent=1 // pred_fallthru
      _
    // Predicated region
    $region18: #{tpu_custom_call.1} parent=1 // pred_check
      _
    $region19: #{tpu_custom_call.1} parent=1 // pred_check_branch
      %159 = sbr.rel (0) target = $region21
    $region20: #{tpu_custom_call.1} parent=1 // pred_region
      %160 = dma.done [#allocation4], 256
    $region21: #{tpu_custom_call.1} parent=1 // pred_fallthru
      _
    %161 = vsyncpa [#allocation3], 1
    %162 = vsyncpa [#allocation4], 1

</llo_original>
